<compile_context>
chip_gen: v7x
topology: tpu7x:2x2x1
jax: 0.10.0
libtpu: 0.0.40
codegen_flags: <defaults>
</compile_context>

<pallas_src>
import functools

import jax
import jax.numpy as jnp
import numpy as np
from jax.experimental import pallas as pl
from jax.experimental.pallas import tpu as pltpu


# ---------------------------------------------------------------------------
# tiling helpers
# ---------------------------------------------------------------------------

def _pick_divisor_tile(dim, unit, target):
    """Largest tile <= target that is a multiple of `unit` and divides `dim`;
    falls back to the full dim (always legal for BlockSpec)."""
    if dim <= target:
        return dim
    t = (target // unit) * unit
    while t >= unit:
        if dim % t == 0:
            return t
        t -= unit
    return dim


def _pick_tiles(batch, num_neurons, max_block_bytes=2 << 20):
    """Pick a (batch_tile, neuron_tile) pair.

    Neuron (lane) tile is chosen first and kept a multiple of 128 (or the full
    dim) so stores are unmasked `vst`; the batch (sublane) tile is then sized
    so one block stays around `max_block_bytes` (bigger tiles amortize the
    ~0.35us per-grid-step overhead on this mem-bound kernel)."""
    tn = _pick_divisor_tile(num_neurons, 128, 2048)
    max_rows = max(8, (max_block_bytes // (tn * 4)))
    tb = _pick_divisor_tile(batch, 8, max_rows)
    return tb, tn


def _vmem_limit_bytes(tile_rows, tile_cols, num_streams):
    # num_streams arrays x double-buffer x block bytes, ~1.5x headroom,
    # clamped so it stays well under v7x's 64 MiB physical VMEM.
    block_bytes = tile_rows * tile_cols * 4
    need = int(block_bytes * 2 * num_streams * 1.5)
    return int(min(max(need, 4 << 20), 48 << 20))


# ---------------------------------------------------------------------------
# single-timestep kernel
# ---------------------------------------------------------------------------

def _step_kernel(x_ref, prev_ref, adapt_ref, prob_ref, new_adapt_ref,
                 *, base_alpha, exp_factor):
    # adaptation_t = adaptation_{t-1} * exp(-1/tau) + prev_spikes
    new_adapt = adapt_ref[...] * exp_factor + prev_ref[...]
    # effective_alpha = base_alpha / (1 + adaptation_t)
    eff_alpha = base_alpha / (1.0 + new_adapt)
    # probability = sigmoid(effective_alpha * x)
    prob_ref[...] = jax.nn.sigmoid(eff_alpha * x_ref[...])
    new_adapt_ref[...] = new_adapt


def dynamic_spike_probability(x, prev_spikes, adaptation,
                              *, base_alpha=1.0, tau_adapt=20.0):
    """Single forward step of DynamicSpikeProbability.

    Args:
      x:            (B, N) - input difference to threshold voltage.
      prev_spikes:  (B, N) - previous-step spike activity (any real dtype).
      adaptation:   (B, N) float32 - adaptation state (aliased to output 1).
    Returns:
      (spike_prob, new_adaptation), both (B, N) float32.
    """
    assert x.shape == prev_spikes.shape == adaptation.shape
    B, N = x.shape
    x = x.astype(jnp.float32)
    prev_spikes = prev_spikes.astype(jnp.float32)   # prev_spikes.float()
    adaptation = adaptation.astype(jnp.float32)
    exp_factor = float(np.exp(-1.0 / float(tau_adapt)))

    kernel = functools.partial(_step_kernel,
                               base_alpha=float(base_alpha),
                               exp_factor=exp_factor)

    tb, tn = _pick_tiles(B, N)
    grid = (pl.cdiv(B, tb), pl.cdiv(N, tn))
    spec = pl.BlockSpec((tb, tn), lambda i, j: (i, j))

    prob, new_adapt = pl.pallas_call(
        kernel,
        grid=grid,
        in_specs=[spec, spec, spec],
        out_specs=[spec, spec],
        out_shape=(
            jax.ShapeDtypeStruct((B, N), jnp.float32),
            jax.ShapeDtypeStruct((B, N), jnp.float32),
        ),
        # adaptation (input 2) aliases new_adaptation (output 1): the recurrent
        # state is updated in place (no fresh HBM buffer each step).
        input_output_aliases={2: 1},
        compiler_params=pltpu.CompilerParams(
            dimension_semantics=("parallel", "parallel"),
            vmem_limit_bytes=_vmem_limit_bytes(tb, tn, num_streams=5),
        ),
    )(x, prev_spikes, adaptation)
    return prob, new_adapt


# ---------------------------------------------------------------------------
# time-fused kernel: run T steps inside one pallas_call, adaptation resident
# in VMEM across the (innermost, "arbitrary") time grid axis.
# ---------------------------------------------------------------------------

def _sequence_kernel(x_ref, prev_ref, adapt0_ref, prob_ref, adapt_ref,
                     *, base_alpha, exp_factor):
    t = pl.program_id(2)

    @pl.when(t == 0)
    def _():
        # Load the initial adaptation state into the time-resident output block.
        adapt_ref[...] = adapt0_ref[...]

    new_adapt = adapt_ref[...] * exp_factor + prev_ref[0]
    eff_alpha = base_alpha / (1.0 + new_adapt)
    prob_ref[0] = jax.nn.sigmoid(eff_alpha * x_ref[0])
    adapt_ref[...] = new_adapt


def dynamic_spike_probability_sequence(xs, prev_spikes_seq, adaptation0,
                                       *, base_alpha=1.0, tau_adapt=20.0):
    """T forward steps fused into one kernel.

    Args:
      xs:              (T, B, N) - inputs per timestep.
      prev_spikes_seq: (T, B, N) - previous-step spikes per timestep.
      adaptation0:     (B, N) float32 - initial adaptation (aliased to output).
    Returns:
      (spike_probs (T, B, N) float32, final_adaptation (B, N) float32).
    """
    T, B, N = xs.shape
    assert prev_spikes_seq.shape == (T, B, N)
    assert adaptation0.shape == (B, N)
    xs = xs.astype(jnp.float32)
    prev_spikes_seq = prev_spikes_seq.astype(jnp.float32)
    adaptation0 = adaptation0.astype(jnp.float32)
    exp_factor = float(np.exp(-1.0 / float(tau_adapt)))

    kernel = functools.partial(_sequence_kernel,
                               base_alpha=float(base_alpha),
                               exp_factor=exp_factor)

    tb, tn = _pick_tiles(B, N)
    # time axis innermost + "arbitrary" (recurrence); batch/neuron "parallel".
    grid = (pl.cdiv(B, tb), pl.cdiv(N, tn), T)

    xt_spec = pl.BlockSpec((1, tb, tn), lambda bi, ni, t: (t, bi, ni))
    state_spec = pl.BlockSpec((tb, tn), lambda bi, ni, t: (bi, ni))  # resident

    probs, adapt_final = pl.pallas_call(
        kernel,
        grid=grid,
        in_specs=[xt_spec, xt_spec, state_spec],
        out_specs=[xt_spec, state_spec],
        out_shape=(
            jax.ShapeDtypeStruct((T, B, N), jnp.float32),
            jax.ShapeDtypeStruct((B, N), jnp.float32),
        ),
        input_output_aliases={2: 1},    # adaptation0 -> final adaptation
        compiler_params=pltpu.CompilerParams(
            dimension_semantics=("parallel", "parallel", "arbitrary"),
            vmem_limit_bytes=_vmem_limit_bytes(tb, tn, num_streams=5),
        ),
    )(xs, prev_spikes_seq, adaptation0)
    return probs, adapt_final


# ---------------------------------------------------------------------------
# pure-JAX reference (mirrors the PyTorch forward)
# ---------------------------------------------------------------------------

def _reference(x, prev_spikes, adaptation, base_alpha=1.0, tau_adapt=20.0):
    exp_factor = jnp.exp(-1.0 / tau_adapt)
    new_adapt = adaptation * exp_factor + prev_spikes
    eff_alpha = base_alpha / (1.0 + new_adapt)
    return jax.nn.sigmoid(eff_alpha * x), new_adapt


if __name__ == "__main__":
    key = jax.random.PRNGKey(0)
    kx, ks, kxt, kst = jax.random.split(key, 4)

    # Lane-dense (N multiple of 128) and sublane-dense (B multiple of 8) demo
    # shapes, consistent with the module's (batch, num_neurons) state.
    batch_size, num_neurons, num_steps = 8, 128, 4
    base_alpha, tau_adapt = 1.0, 20.0

    # ---------------- single step ----------------
    x = jax.random.normal(kx, (batch_size, num_neurons), dtype=jnp.float32)
    prev_spikes = (jax.random.uniform(ks, (batch_size, num_neurons)) > 0.5
                   ).astype(jnp.float32)
    adaptation = jnp.zeros((batch_size, num_neurons), dtype=jnp.float32)

    r_prob, r_adapt = _reference(x, prev_spikes, adaptation,
                                 base_alpha, tau_adapt)

    prob, new_adapt = dynamic_spike_probability(
        x, prev_spikes, adaptation, base_alpha=base_alpha, tau_adapt=tau_adapt)
    jax.block_until_ready((prob, new_adapt))

    np.testing.assert_allclose(np.asarray(new_adapt), np.asarray(r_adapt),
                               rtol=1e-6, atol=1e-6)
    np.testing.assert_allclose(np.asarray(prob), np.asarray(r_prob),
                               rtol=1e-5, atol=1e-5)

    # ---------------- fused time loop ----------------
    xs = jax.random.normal(kxt, (num_steps, batch_size, num_neurons),
                           dtype=jnp.float32)
    prevs = (jax.random.uniform(kst, (num_steps, batch_size, num_neurons))
             > 0.5).astype(jnp.float32)
    adaptation0 = jnp.zeros((batch_size, num_neurons), dtype=jnp.float32)

    ref_probs = []
    a = adaptation0
    for t in range(num_steps):
        p, a = _reference(xs[t], prevs[t], a, base_alpha, tau_adapt)
        ref_probs.append(p)
    ref_probs = jnp.stack(ref_probs)

    probs_seq, adapt_final = dynamic_spike_probability_sequence(
        xs, prevs, adaptation0, base_alpha=base_alpha, tau_adapt=tau_adapt)
    jax.block_until_ready((probs_seq, adapt_final))

    np.testing.assert_allclose(np.asarray(adapt_final), np.asarray(a),
                               rtol=1e-6, atol=1e-6)
    np.testing.assert_allclose(np.asarray(probs_seq), np.asarray(ref_probs),
                               rtol=1e-5, atol=1e-5)

    print("KERNEL_OK")
</pallas_src>

<mosaic_0001>
module attributes {stable_mosaic.version = 11 : i64} {
  func.func @_step_kernel(%arg0: i32, %arg1: i32, %arg2: memref<8x128xf32, #tpu.memory_space<vmem>>, %arg3: memref<8x128xf32, #tpu.memory_space<vmem>>, %arg4: memref<8x128xf32, #tpu.memory_space<vmem>>, %arg5: memref<8x128xf32, #tpu.memory_space<vmem>>, %arg6: memref<8x128xf32, #tpu.memory_space<vmem>>) attributes {dimension_semantics = [#tpu.dimension_semantics<parallel>, #tpu.dimension_semantics<parallel>], iteration_bounds = array<i64: 1, 1>, scalar_prefetch = 0 : i64, scratch_operands = 0 : i64, tpu.core_type = #tpu.core_type<tc>, window_params = [{transform_indices = @transform_0, window_bounds = array<i64: 8, 128>}, {transform_indices = @transform_1, window_bounds = array<i64: 8, 128>}, {transform_indices = @transform_2, window_bounds = array<i64: 8, 128>}, {transform_indices = @transform_3, window_bounds = array<i64: 8, 128>}, {transform_indices = @transform_4, window_bounds = array<i64: 8, 128>}]} {
    %c0 = arith.constant 0 : index
    %c0_0 = arith.constant 0 : index
    %0 = vector.load %arg4[%c0, %c0_0] : memref<8x128xf32, #tpu.memory_space<vmem>>, vector<8x128xf32>
    %cst = arith.constant 0.951229453 : f32
    %1 = vector.broadcast %cst : f32 to vector<8x128xf32>
    %2 = arith.mulf %0, %1 : vector<8x128xf32>
    %c0_1 = arith.constant 0 : index
    %c0_2 = arith.constant 0 : index
    %3 = vector.load %arg3[%c0_1, %c0_2] : memref<8x128xf32, #tpu.memory_space<vmem>>, vector<8x128xf32>
    %4 = arith.addf %2, %3 : vector<8x128xf32>
    %cst_3 = arith.constant 1.000000e+00 : f32
    %5 = vector.broadcast %cst_3 : f32 to vector<8x128xf32>
    %6 = arith.addf %5, %4 : vector<8x128xf32>
    %cst_4 = arith.constant 1.000000e+00 : f32
    %7 = vector.broadcast %cst_4 : f32 to vector<8x128xf32>
    %8 = arith.divf %7, %6 : vector<8x128xf32>
    %c0_5 = arith.constant 0 : index
    %c0_6 = arith.constant 0 : index
    %9 = vector.load %arg2[%c0_5, %c0_6] : memref<8x128xf32, #tpu.memory_space<vmem>>, vector<8x128xf32>
    %10 = arith.mulf %8, %9 : vector<8x128xf32>
    %11 = arith.negf %10 : vector<8x128xf32>
    %12 = math.exp %11 : vector<8x128xf32>
    %cst_7 = arith.constant 1.000000e+00 : f32
    %13 = vector.broadcast %cst_7 : f32 to vector<8x128xf32>
    %14 = arith.addf %13, %12 : vector<8x128xf32>
    %15 = arith.divf %13, %14 : vector<8x128xf32>
    %c0_8 = arith.constant 0 : index
    %c0_9 = arith.constant 0 : index
    %16 = vector.load %arg5[%c0_8, %c0_9] : memref<8x128xf32, #tpu.memory_space<vmem>>, vector<8x128xf32>
    tpu.vector_store %arg5[%c0_8, %c0_9], %15 {strides = array<i32>} : memref<8x128xf32, #tpu.memory_space<vmem>>, vector<8x128xf32>,
    %c0_10 = arith.constant 0 : index
    %c0_11 = arith.constant 0 : index
    %17 = vector.load %arg6[%c0_10, %c0_11] : memref<8x128xf32, #tpu.memory_space<vmem>>, vector<8x128xf32>
    tpu.vector_store %arg6[%c0_10, %c0_11], %4 {strides = array<i32>} : memref<8x128xf32, #tpu.memory_space<vmem>>, vector<8x128xf32>,
    return
  }
  func.func @transform_0(%arg0: i32, %arg1: i32) -> (i32, i32) {
    %c0_i32 = arith.constant 0 : i32
    return %arg0, %arg1 : i32, i32
  }
  func.func @transform_1(%arg0: i32, %arg1: i32) -> (i32, i32) {
    %c0_i32 = arith.constant 0 : i32
    return %arg0, %arg1 : i32, i32
  }
  func.func @transform_2(%arg0: i32, %arg1: i32) -> (i32, i32) {
    %c0_i32 = arith.constant 0 : i32
    return %arg0, %arg1 : i32, i32
  }
  func.func @transform_3(%arg0: i32, %arg1: i32) -> (i32, i32) {
    %c0_i32 = arith.constant 0 : i32
    return %arg0, %arg1 : i32, i32
  }
  func.func @transform_4(%arg0: i32, %arg1: i32) -> (i32, i32) {
    %c0_i32 = arith.constant 0 : i32
    return %arg0, %arg1 : i32, i32
  }
}

</mosaic_0001>

<llo_original>
// kernel: tpu_custom_call.1
$region0: #{tpu_custom_call.1}
  #allocation0 [shape = 'u32[]', space=smem, size = 0x4, offset = 0x4, fixed_abs, tag = 'smem constant byte address 0x4 - core index']
  #allocation1 [shape = 'u32[144,128]{1,0:T(1,128)}', space=vmem, size = 0x12000, scoped, tag = 'internal scratch']
  %s0 = inlined_call_operand.vmem [shape: f32[8,128], index: 0, kind: input, shape index: {}]
  %s1 = inlined_call_operand.vmem [shape: f32[8,128], index: 1, kind: input, shape index: {}]
  %s2 = inlined_call_operand.hbm [shape: f32[8,128], index: 2, kind: input, shape index: {}, may-alias: {2,4}]
  %s3 = inlined_call_operand.hbm [shape: f32[8,128], index: 3, kind: output, shape index: {0}]
  %s4 = inlined_call_operand.hbm [shape: f32[8,128], index: 4, kind: output, shape index: {1}, may-alias: {2,4}]
  %5 = xla_tuple %s3, %s4
  %s6 = sld [smem:[#allocation0]]
  $region34: #{tpu_custom_call.1} parent=0
    _
  %s8 = ssub.s32 1, %s6
  %s9 = scalar_select 0, %s8, %s6
  $region1: #{tpu_custom_call.1} parent=0
    #allocation2 [shape = 'u8[4096]{0}', space=vmem, size = 0x1000, scoped, tag = 'input window, operand 2, single buffered']
    #allocation3 [shape = 's32[1]{0}', space=sflag, size = 0x4, scoped, tag = 'scoped memory for tpu_custom_call.1']
    #allocation4 [shape = 's32[1]{0}', space=sflag, size = 0x4, scoped, tag = 'scoped memory for tpu_custom_call.1']
    #allocation5 [shape = 'u8[4096]{0}', space=vmem, size = 0x1000, scoped, tag = 'output window, operand 0, single buffered']
    #allocation6 [shape = 'u8[4096]{0}', space=vmem, size = 0x1000, scoped, tag = 'output window, operand 1, single buffered']
    #allocation7 [shape = 's32[1]{0}', space=sflag, size = 0x4, scoped, tag = 'scoped memory for tpu_custom_call.1']
    %10 = vsyncpa [#allocation3], 0
    %11 = vsyncpa [#allocation4], 0
    %12 = vsyncpa [#allocation7], 0
    // Predicated region
    $region2: #{tpu_custom_call.1} parent=1 // pred_check
      _
    $region3: #{tpu_custom_call.1} parent=1 // pred_check_branch
      %14 = sbr.rel (0) target = $region5
    $region4: #{tpu_custom_call.1} parent=1 // pred_region
      _
    $region5: #{tpu_custom_call.1} parent=1 // pred_fallthru
      _
    // Predicated region
    $region6: #{tpu_custom_call.1} parent=1 // pred_check
      _
    $region7: #{tpu_custom_call.1} parent=1 // pred_check_branch
      %16 = sbr.rel (0) target = $region9
    $region8: #{tpu_custom_call.1} parent=1 // pred_region
      _
    $region9: #{tpu_custom_call.1} parent=1 // pred_fallthru
      _
    // Predicated region
    $region10: #{tpu_custom_call.1} parent=1 // pred_check
      _
    $region11: #{tpu_custom_call.1} parent=1 // pred_check_branch
      %18 = sbr.rel (0) target = $region13
    $region12: #{tpu_custom_call.1} parent=1 // pred_region
      %s20 = ssub.s32 128, 128
      %21 = vsyncadd [#allocation3], %s20
      %s23 = sshll.u32 [#allocation2], 4
      %s24 = int_to_ptr.vmem [resolvable:$true] %s23
      %26 = dma.hbm_to_vmem [thread:$0]  %s2, 128, %s24, [#allocation3]
    $region13: #{tpu_custom_call.1} parent=1 // pred_fallthru
      _
    // Predicated region
    $region14: #{tpu_custom_call.1} parent=1 // pred_check
      _
    $region15: #{tpu_custom_call.1} parent=1 // pred_check_branch
      %28 = sbr.rel (0) target = $region17
    $region16: #{tpu_custom_call.1} parent=1 // pred_region
      %29 = dma.done [#allocation3], 128
    $region17: #{tpu_custom_call.1} parent=1 // pred_fallthru
      _
    %v30 = vld [vmem:[#allocation2] sm:$0xff]
    %v31 = vmul.f32 %v30, 0.95122945
    %v32 = vld [vmem:[%s1] sm:$0xff]
    %v33 = vadd.f32 %v31, %v32
    %v34 = vadd.f32 %v33, 1.0
    %v35 = vrcp.pop %v34
    %v36 = vmul.f32 1.0, %v35
    %v37 = vld [vmem:[%s0] sm:$0xff]
    %v38 = vmul.f32 %v36, %v37
    %v39 = vxor.u32 %v38, 2147483648
    %v40 = vmul.f32 %v39, 1.442695
    %v41 = vpow.pop %v40
    %v42 = vadd.f32 %v41, 1.0
    %v43 = vrcp.pop %v42
    %v44 = vmul.f32 1.0, %v43
    %45 = vst [vmem:[#allocation5] sm:$0xff] %v44
    %46 = vst [vmem:[#allocation6] sm:$0xff] %v33
    // Predicated region
    $region18: #{tpu_custom_call.1} parent=1 // pred_check
      _
    $region19: #{tpu_custom_call.1} parent=1 // pred_check_branch
      %48 = sbr.rel (0) target = $region21
    $region20: #{tpu_custom_call.1} parent=1 // pred_region
      %s50 = ssub.s32 128, 128
      %51 = vsyncadd [#allocation4], %s50
      %s53 = sshll.u32 [#allocation5], 4
      %s54 = int_to_ptr.vmem [resolvable:$true] %s53
      %56 = dma.vmem_to_hbm [thread:$0]  %s54, 128, %s3, [#allocation4]
    $region21: #{tpu_custom_call.1} parent=1 // pred_fallthru
      _
    // Predicated region
    $region22: #{tpu_custom_call.1} parent=1 // pred_check
      _
    $region23: #{tpu_custom_call.1} parent=1 // pred_check_branch
      %58 = sbr.rel (0) target = $region25
    $region24: #{tpu_custom_call.1} parent=1 // pred_region
      %s60 = ssub.s32 128, 128
      %61 = vsyncadd [#allocation7], %s60
      %s63 = sshll.u32 [#allocation6], 4
      %s64 = int_to_ptr.vmem [resolvable:$true] %s63
      %66 = dma.vmem_to_hbm [thread:$0]  %s64, 128, %s4, [#allocation7]
    $region25: #{tpu_custom_call.1} parent=1 // pred_fallthru
      _
    // Predicated region
    $region26: #{tpu_custom_call.1} parent=1 // pred_check
      _
    $region27: #{tpu_custom_call.1} parent=1 // pred_check_branch
      %68 = sbr.rel (0) target = $region29
    $region28: #{tpu_custom_call.1} parent=1 // pred_region
      %69 = dma.done [#allocation4], 128
    $region29: #{tpu_custom_call.1} parent=1 // pred_fallthru
      _
    // Predicated region
    $region30: #{tpu_custom_call.1} parent=1 // pred_check
      _
    $region31: #{tpu_custom_call.1} parent=1 // pred_check_branch
      %71 = sbr.rel (0) target = $region33
    $region32: #{tpu_custom_call.1} parent=1 // pred_region
      %72 = dma.done [#allocation7], 128
    $region33: #{tpu_custom_call.1} parent=1 // pred_fallthru
      _
    %73 = vsyncpa [#allocation3], 1
    %74 = vsyncpa [#allocation4], 1
    %75 = vsyncpa [#allocation7], 1

</llo_original>
